<compile_context>
chip_gen: v5e
topology: v5e:2x2
jax: 0.10.0
libtpu: 0.0.40
codegen_flags: <defaults>
</compile_context>

<pallas_src>
import functools

import jax
import jax.numpy as jnp
from jax.experimental import pallas as pl
from jax.experimental.pallas import tpu as pltpu


def _maxpool_bn_kernel(x_ref, o_ref, xpad_ref, *, K, stride, padding,
                       H, W, Ho, Wo, eps):
    """One C-tile: x_ref (N, H, W, Ct) -> o_ref (N, Ho, Wo, Ct).

    xpad_ref: VMEM scratch (N, H+2p, W+2p, Ct) holding the -inf halo so the
    host never materializes a padded copy in HBM.
    """
    N = x_ref.shape[0]
    Ct = x_ref.shape[-1]

    # ---- in-kernel -inf halo (VMEM only, all math in f32) ----
    xpad_ref[...] = jnp.full(xpad_ref.shape, -jnp.inf, dtype=xpad_ref.dtype)
    xpad_ref[:, padding:padding + H, padding:padding + W, :] = (
        x_ref[...].astype(jnp.float32))

    # ---- max pooling: K*K shifted, strided taps ----
    # Channels (lanes) are contiguous; the subsample strides hit only the
    # H (outer) and W (sublane) axes.
    pooled = jnp.full((N, Ho, Wo, Ct), -jnp.inf, dtype=jnp.float32)
    for kh in range(K):
        for kw in range(K):
            win = xpad_ref[:,
                           pl.ds(kh, Ho, stride=stride),
                           pl.ds(kw, Wo, stride=stride),
                           :]
            pooled = jnp.maximum(pooled, win)

    # ---- BatchNorm2d(affine=False), training mode: batch statistics ----
    # mean / biased var over (N, Ho, Wo) per channel -> per-lane reduction.
    mean = jnp.mean(pooled, axis=(0, 1, 2), keepdims=True)
    var = jnp.mean((pooled - mean) ** 2, axis=(0, 1, 2), keepdims=True)
    out = (pooled - mean) * jax.lax.rsqrt(var + eps)

    o_ref[...] = out.astype(o_ref.dtype)


def _pick_c_tile(N, H, W, Hp, Wp, Ho, Wo, C, itemsize,
                 budget_bytes=16 * 1024 * 1024):
    """Largest lane-legal C tile whose block footprint fits a ~16 MiB budget
    (sized so double-buffered blocks stay comfortably inside v7x's 64 MiB VMEM)."""

    def footprint(ct):
        in_blk = N * H * W * ct * itemsize
        out_blk = N * Ho * Wo * ct * itemsize
        pad_scr = N * Hp * Wp * ct * 4
        tmp = 2 * N * Ho * Wo * ct * 4            # pooled + window temporaries
        return 2 * (in_blk + out_blk) + pad_scr + tmp   # 2x = double buffering

    if C % 128 == 0:
        ct = C
        while ct > 128 and (C % ct != 0 or footprint(ct) > budget_bytes):
            ct -= 128
        return max(ct, 128)
    # Small / non-multiple-of-128 C: keep the full channel extent in one block
    # (lane dim must be a multiple of 128 or the full array dim).
    return C


def maxpool2d_bn(x, kernel_size, stride, padding, eps=1e-5):
    """MaxPool2d(kernel_size, stride, padding) + BatchNorm2d(C, affine=False)."""
    N, C, H, W = x.shape
    K = kernel_size
    Ho = (H + 2 * padding - K) // stride + 1
    Wo = (W + 2 * padding - K) // stride + 1
    Hp, Wp = H + 2 * padding, W + 2 * padding

    # PyTorch invariant; also guarantees no all-(-inf) window (which would
    # produce NaN/Inf after BatchNorm).
    assert padding <= K // 2, "padding must be <= kernel_size // 2"

    # Channels-last inside the kernel (lane-dense C); transposed back below.
    x_nhwc = jnp.transpose(x, (0, 2, 3, 1))

    c_tile = _pick_c_tile(N, H, W, Hp, Wp, Ho, Wo, C, x.dtype.itemsize)
    grid_c = C // c_tile

    kernel = functools.partial(
        _maxpool_bn_kernel, K=K, stride=stride, padding=padding,
        H=H, W=W, Ho=Ho, Wo=Wo, eps=eps)

    out_nhwc = pl.pallas_call(
        kernel,
        out_shape=jax.ShapeDtypeStruct((N, Ho, Wo, C), x.dtype),
        grid_spec=pltpu.PrefetchScalarGridSpec(
            num_scalar_prefetch=0,
            grid=(grid_c,),
            # Each C-tile block sees the full (N, H, W) extent, so the
            # per-channel BN statistics stay exact with no cross-tile pass.
            in_specs=[pl.BlockSpec((N, H, W, c_tile), lambda c: (0, 0, 0, c))],
            out_specs=pl.BlockSpec((N, Ho, Wo, c_tile), lambda c: (0, 0, 0, c)),
            scratch_shapes=[pltpu.VMEM((N, Hp, Wp, c_tile), jnp.float32)],
        ),
        compiler_params=pltpu.CompilerParams(
            dimension_semantics=("parallel",),        # v7x: shard C over 2 TCs
            vmem_limit_bytes=48 * 1024 * 1024,        # explicit, < v7x 64 MiB
        ),
    )(x_nhwc)

    return jnp.transpose(out_nhwc, (0, 3, 1, 2))


def _reference(x, kernel_size, stride, padding, eps=1e-5):
    """Pure-JAX reference (reduce_window maxpool + batch-stat BN)."""
    xp = jnp.pad(
        x,
        ((0, 0), (0, 0), (padding, padding), (padding, padding)),
        constant_values=-jnp.inf,
    )
    pooled = jax.lax.reduce_window(
        xp, -jnp.inf, jax.lax.max,
        window_dimensions=(1, 1, kernel_size, kernel_size),
        window_strides=(1, 1, stride, stride),
        padding="VALID",
    )
    mean = jnp.mean(pooled, axis=(0, 2, 3), keepdims=True)
    var = jnp.mean((pooled - mean) ** 2, axis=(0, 2, 3), keepdims=True)
    return (pooled - mean) * jax.lax.rsqrt(var + eps)


if __name__ == "__main__":
    # Module config: MaxPool2d(kernel_size=3, C=4, stride=2, padding=1)
    kernel_size, C, stride, padding = 3, 4, 2, 1

    key = jax.random.PRNGKey(0)
    x = jax.random.normal(key, (2, C, 16, 16), dtype=jnp.float32)

    out = maxpool2d_bn(x, kernel_size, stride, padding)
    out = jax.block_until_ready(out)

    ref = _reference(x, kernel_size, stride, padding)
    assert out.shape == (2, C, 8, 8), out.shape
    assert jnp.allclose(out, ref, atol=1e-5, rtol=1e-5), "mismatch vs reference"

    print("KERNEL_OK")
</pallas_src>

<mosaic_0001>
module attributes {stable_mosaic.version = 11 : i64} {
  func.func @_maxpool_bn_kernel(%arg0: i32, %arg1: memref<2x16x16x4xf32, #tpu.memory_space<vmem>>, %arg2: memref<2x8x8x4xf32, #tpu.memory_space<vmem>>, %arg3: memref<2x18x18x4xf32, #tpu.memory_space<vmem>>) attributes {dimension_semantics = [#tpu.dimension_semantics<parallel>], iteration_bounds = array<i64: 1>, scalar_prefetch = 0 : i64, scratch_operands = 1 : i64, tpu.core_type = #tpu.core_type<tc>, window_params = [{transform_indices = @transform_0, window_bounds = array<i64: 2, 16, 16, 4>}, {transform_indices = @transform_1, window_bounds = array<i64: 2, 8, 8, 4>}]} {
    %cst = arith.constant 0xFF800000 : f32
    %0 = vector.broadcast %cst : f32 to vector<2x18x18x4xf32>
    %c0 = arith.constant 0 : index
    %c0_0 = arith.constant 0 : index
    %c0_1 = arith.constant 0 : index
    %c0_2 = arith.constant 0 : index
    %1 = vector.load %arg3[%c0, %c0_0, %c0_1, %c0_2] : memref<2x18x18x4xf32, #tpu.memory_space<vmem>>, vector<2x18x18x4xf32>
    tpu.vector_store %arg3[%c0, %c0_0, %c0_1, %c0_2], %0 {strides = array<i32>} : memref<2x18x18x4xf32, #tpu.memory_space<vmem>>, vector<2x18x18x4xf32>,
    %c0_3 = arith.constant 0 : index
    %c0_4 = arith.constant 0 : index
    %c0_5 = arith.constant 0 : index
    %c0_6 = arith.constant 0 : index
    %2 = vector.load %arg1[%c0_3, %c0_4, %c0_5, %c0_6] : memref<2x16x16x4xf32, #tpu.memory_space<vmem>>, vector<2x16x16x4xf32>
    %c0_7 = arith.constant 0 : index
    %c1 = arith.constant 1 : index
    %c1_8 = arith.constant 1 : index
    %c0_9 = arith.constant 0 : index
    %3 = vector.load %arg3[%c0_7, %c1, %c1_8, %c0_9] : memref<2x18x18x4xf32, #tpu.memory_space<vmem>>, vector<2x16x16x4xf32>
    tpu.vector_store %arg3[%c0_7, %c1, %c1_8, %c0_9], %2 {strides = array<i32>} : memref<2x18x18x4xf32, #tpu.memory_space<vmem>>, vector<2x16x16x4xf32>,
    %cst_10 = arith.constant 0xFF800000 : f32
    %4 = vector.broadcast %cst_10 : f32 to vector<2x8x8x4xf32>
    %c0_11 = arith.constant 0 : index
    %c0_12 = arith.constant 0 : index
    %c0_13 = arith.constant 0 : index
    %c0_14 = arith.constant 0 : index
    %5 = tpu.strided_load %arg3[%c0_11, %c0_12, %c0_13, %c0_14] {strides = array<i32: 1, 2, 2, 1>} : memref<2x18x18x4xf32, #tpu.memory_space<vmem>>, vector<2x8x8x4xf32>
    %6 = arith.maximumf %4, %5 : vector<2x8x8x4xf32>
    %c0_15 = arith.constant 0 : index
    %c0_16 = arith.constant 0 : index
    %c1_17 = arith.constant 1 : index
    %c0_18 = arith.constant 0 : index
    %7 = tpu.strided_load %arg3[%c0_15, %c0_16, %c1_17, %c0_18] {strides = array<i32: 1, 2, 2, 1>} : memref<2x18x18x4xf32, #tpu.memory_space<vmem>>, vector<2x8x8x4xf32>
    %8 = arith.maximumf %6, %7 : vector<2x8x8x4xf32>
    %c0_19 = arith.constant 0 : index
    %c0_20 = arith.constant 0 : index
    %c2 = arith.constant 2 : index
    %c0_21 = arith.constant 0 : index
    %9 = tpu.strided_load %arg3[%c0_19, %c0_20, %c2, %c0_21] {strides = array<i32: 1, 2, 2, 1>} : memref<2x18x18x4xf32, #tpu.memory_space<vmem>>, vector<2x8x8x4xf32>
    %10 = arith.maximumf %8, %9 : vector<2x8x8x4xf32>
    %c0_22 = arith.constant 0 : index
    %c1_23 = arith.constant 1 : index
    %c0_24 = arith.constant 0 : index
    %c0_25 = arith.constant 0 : index
    %11 = tpu.strided_load %arg3[%c0_22, %c1_23, %c0_24, %c0_25] {strides = array<i32: 1, 2, 2, 1>} : memref<2x18x18x4xf32, #tpu.memory_space<vmem>>, vector<2x8x8x4xf32>
    %12 = arith.maximumf %10, %11 : vector<2x8x8x4xf32>
    %c0_26 = arith.constant 0 : index
    %c1_27 = arith.constant 1 : index
    %c1_28 = arith.constant 1 : index
    %c0_29 = arith.constant 0 : index
    %13 = tpu.strided_load %arg3[%c0_26, %c1_27, %c1_28, %c0_29] {strides = array<i32: 1, 2, 2, 1>} : memref<2x18x18x4xf32, #tpu.memory_space<vmem>>, vector<2x8x8x4xf32>
    %14 = arith.maximumf %12, %13 : vector<2x8x8x4xf32>
    %c0_30 = arith.constant 0 : index
    %c1_31 = arith.constant 1 : index
    %c2_32 = arith.constant 2 : index
    %c0_33 = arith.constant 0 : index
    %15 = tpu.strided_load %arg3[%c0_30, %c1_31, %c2_32, %c0_33] {strides = array<i32: 1, 2, 2, 1>} : memref<2x18x18x4xf32, #tpu.memory_space<vmem>>, vector<2x8x8x4xf32>
    %16 = arith.maximumf %14, %15 : vector<2x8x8x4xf32>
    %c0_34 = arith.constant 0 : index
    %c2_35 = arith.constant 2 : index
    %c0_36 = arith.constant 0 : index
    %c0_37 = arith.constant 0 : index
    %17 = tpu.strided_load %arg3[%c0_34, %c2_35, %c0_36, %c0_37] {strides = array<i32: 1, 2, 2, 1>} : memref<2x18x18x4xf32, #tpu.memory_space<vmem>>, vector<2x8x8x4xf32>
    %18 = arith.maximumf %16, %17 : vector<2x8x8x4xf32>
    %c0_38 = arith.constant 0 : index
    %c2_39 = arith.constant 2 : index
    %c1_40 = arith.constant 1 : index
    %c0_41 = arith.constant 0 : index
    %19 = tpu.strided_load %arg3[%c0_38, %c2_39, %c1_40, %c0_41] {strides = array<i32: 1, 2, 2, 1>} : memref<2x18x18x4xf32, #tpu.memory_space<vmem>>, vector<2x8x8x4xf32>
    %20 = arith.maximumf %18, %19 : vector<2x8x8x4xf32>
    %c0_42 = arith.constant 0 : index
    %c2_43 = arith.constant 2 : index
    %c2_44 = arith.constant 2 : index
    %c0_45 = arith.constant 0 : index
    %21 = tpu.strided_load %arg3[%c0_42, %c2_43, %c2_44, %c0_45] {strides = array<i32: 1, 2, 2, 1>} : memref<2x18x18x4xf32, #tpu.memory_space<vmem>>, vector<2x8x8x4xf32>
    %22 = arith.maximumf %20, %21 : vector<2x8x8x4xf32>
    %cst_46 = arith.constant dense<0.000000e+00> : vector<4xf32>
    %23 = vector.multi_reduction <add>, %22, %cst_46 [0, 1, 2] : vector<2x8x8x4xf32> to vector<4xf32>
    %24 = vector.shape_cast %23 : vector<4xf32> to vector<1x1x1x4xf32>
    %cst_47 = arith.constant 1.280000e+02 : f32
    %25 = vector.broadcast %cst_47 : f32 to vector<1x1x1x4xf32>
    %26 = arith.divf %24, %25 : vector<1x1x1x4xf32>
    %27 = vector.broadcast %26 : vector<1x1x1x4xf32> to vector<2x8x8x4xf32>
    %28 = arith.subf %22, %27 : vector<2x8x8x4xf32>
    %29 = arith.mulf %28, %28 : vector<2x8x8x4xf32>
    %cst_48 = arith.constant dense<0.000000e+00> : vector<4xf32>
    %30 = vector.multi_reduction <add>, %29, %cst_48 [0, 1, 2] : vector<2x8x8x4xf32> to vector<4xf32>
    %31 = vector.shape_cast %30 : vector<4xf32> to vector<1x1x1x4xf32>
    %cst_49 = arith.constant 1.280000e+02 : f32
    %32 = vector.broadcast %cst_49 : f32 to vector<1x1x1x4xf32>
    %33 = arith.divf %31, %32 : vector<1x1x1x4xf32>
    %34 = vector.broadcast %26 : vector<1x1x1x4xf32> to vector<2x8x8x4xf32>
    %35 = arith.subf %22, %34 : vector<2x8x8x4xf32>
    %cst_50 = arith.constant 9.99999974E-6 : f32
    %36 = vector.broadcast %cst_50 : f32 to vector<1x1x1x4xf32>
    %37 = arith.addf %33, %36 : vector<1x1x1x4xf32>
    %38 = math.rsqrt %37 : vector<1x1x1x4xf32>
    %39 = vector.broadcast %38 : vector<1x1x1x4xf32> to vector<2x8x8x4xf32>
    %40 = arith.mulf %35, %39 : vector<2x8x8x4xf32>
    %c0_51 = arith.constant 0 : index
    %c0_52 = arith.constant 0 : index
    %c0_53 = arith.constant 0 : index
    %c0_54 = arith.constant 0 : index
    %41 = vector.load %arg2[%c0_51, %c0_52, %c0_53, %c0_54] : memref<2x8x8x4xf32, #tpu.memory_space<vmem>>, vector<2x8x8x4xf32>
    tpu.vector_store %arg2[%c0_51, %c0_52, %c0_53, %c0_54], %40 {strides = array<i32>} : memref<2x8x8x4xf32, #tpu.memory_space<vmem>>, vector<2x8x8x4xf32>,
    return
  }
  func.func @transform_0(%arg0: i32) -> (i32, i32, i32, i32) {
    %c0_i32 = arith.constant 0 : i32
    %c0_i32_0 = arith.constant 0 : i32
    %c0_i32_1 = arith.constant 0 : i32
    %c0_i32_2 = arith.constant 0 : i32
    return %c0_i32, %c0_i32_0, %c0_i32_1, %arg0 : i32, i32, i32, i32
  }
  func.func @transform_1(%arg0: i32) -> (i32, i32, i32, i32) {
    %c0_i32 = arith.constant 0 : i32
    %c0_i32_0 = arith.constant 0 : i32
    %c0_i32_1 = arith.constant 0 : i32
    %c0_i32_2 = arith.constant 0 : i32
    return %c0_i32, %c0_i32_0, %c0_i32_1, %arg0 : i32, i32, i32, i32
  }
}

</mosaic_0001>

<llo_original>
// kernel: tpu_custom_call.1
$region0: #{tpu_custom_call.1}
  #allocation0 [shape = 'u32[]', space=smem, size = 0x4, offset = 0x4, fixed_abs, tag = 'smem constant byte address 0x4 - core index']
  #allocation1 [shape = 'u32[72,128]{1,0:T(1,128)}', space=vmem, size = 0x9000, scoped, tag = 'internal scratch']
  #allocation2 [shape = 'f32[2,18,18,4]{3,2,1,0:T(8,128)}', space=vmem, size = 0x6c000, scoped, tag = 'scratch operand']
  %s0 = inlined_call_operand.vmem [shape: f32[2,16,16,4], index: 0, kind: input, shape index: {}]
  %s1 = inlined_call_operand.vmem [shape: f32[2,8,8,4], index: 1, kind: output, shape index: {}]
  %s2 = sld [smem:[#allocation0]]
  $region14: #{tpu_custom_call.1} parent=0
    _
  %s4 = ssub.s32 1, %s2
  %s5 = scalar_select 0, %s4, %s2
  // Predicated region
  $region2: #{tpu_custom_call.1} parent=0 // pred_check
    _
  $region3: #{tpu_custom_call.1} parent=0 // pred_check_branch
    %7 = sbr.rel (0) target = $region5
  $region4: #{tpu_custom_call.1} parent=0 // pred_region
    _
  $region5: #{tpu_custom_call.1} parent=0 // pred_fallthru
    _
  %vm8 = vcmask 31744
  %9 = vst.msk [vmem:[#allocation2] sm:$0xff] %vm8, -inf
  %10 = vst.msk [vmem:[#allocation2 + $0x8] sm:$0xff] %vm8, -inf
  %vm11 = vcmask 25600
  %12 = vst.msk [vmem:[#allocation2 + $0x10] sm:$0x3] %vm11, -inf
  %13 = vst.msk [vmem:[#allocation2 + $0x18] sm:$0xff] %vm8, -inf
  %14 = vst.msk [vmem:[#allocation2 + $0x20] sm:$0xff] %vm8, -inf
  %15 = vst.msk [vmem:[#allocation2 + $0x28] sm:$0x3] %vm11, -inf
  %16 = vst.msk [vmem:[#allocation2 + $0x30] sm:$0xff] %vm8, -inf
  %17 = vst.msk [vmem:[#allocation2 + $0x38] sm:$0xff] %vm8, -inf
  %18 = vst.msk [vmem:[#allocation2 + $0x40] sm:$0x3] %vm11, -inf
  %19 = vst.msk [vmem:[#allocation2 + $0x48] sm:$0xff] %vm8, -inf
  %20 = vst.msk [vmem:[#allocation2 + $0x50] sm:$0xff] %vm8, -inf
  %21 = vst.msk [vmem:[#allocation2 + $0x58] sm:$0x3] %vm11, -inf
  %22 = vst.msk [vmem:[#allocation2 + $0x60] sm:$0xff] %vm8, -inf
  %23 = vst.msk [vmem:[#allocation2 + $0x68] sm:$0xff] %vm8, -inf
  %24 = vst.msk [vmem:[#allocation2 + $0x70] sm:$0x3] %vm11, -inf
  %25 = vst.msk [vmem:[#allocation2 + $0x78] sm:$0xff] %vm8, -inf
  %26 = vst.msk [vmem:[#allocation2 + $0x80] sm:$0xff] %vm8, -inf
  %27 = vst.msk [vmem:[#allocation2 + $0x88] sm:$0x3] %vm11, -inf
  %28 = vst.msk [vmem:[#allocation2 + $0x90] sm:$0xff] %vm8, -inf
  %29 = vst.msk [vmem:[#allocation2 + $0x98] sm:$0xff] %vm8, -inf
  %30 = vst.msk [vmem:[#allocation2 + $0xa0] sm:$0x3] %vm11, -inf
  %31 = vst.msk [vmem:[#allocation2 + $0xa8] sm:$0xff] %vm8, -inf
  %32 = vst.msk [vmem:[#allocation2 + $0xb0] sm:$0xff] %vm8, -inf
  %33 = vst.msk [vmem:[#allocation2 + $0xb8] sm:$0x3] %vm11, -inf
  %34 = vst.msk [vmem:[#allocation2 + $0xc0] sm:$0xff] %vm8, -inf
  %35 = vst.msk [vmem:[#allocation2 + $0xc8] sm:$0xff] %vm8, -inf
  %36 = vst.msk [vmem:[#allocation2 + $0xd0] sm:$0x3] %vm11, -inf
  %37 = vst.msk [vmem:[#allocation2 + $0xd8] sm:$0xff] %vm8, -inf
  %38 = vst.msk [vmem:[#allocation2 + $0xe0] sm:$0xff] %vm8, -inf
  %39 = vst.msk [vmem:[#allocation2 + $0xe8] sm:$0x3] %vm11, -inf
  %40 = vst.msk [vmem:[#allocation2 + $0xf0] sm:$0xff] %vm8, -inf
  %41 = vst.msk [vmem:[#allocation2 + $0xf8] sm:$0xff] %vm8, -inf
  %42 = vst.msk [vmem:[#allocation2 + $0x100] sm:$0x3] %vm11, -inf
  %43 = vst.msk [vmem:[#allocation2 + $0x108] sm:$0xff] %vm8, -inf
  %44 = vst.msk [vmem:[#allocation2 + $0x110] sm:$0xff] %vm8, -inf
  %45 = vst.msk [vmem:[#allocation2 + $0x118] sm:$0x3] %vm11, -inf
  %46 = vst.msk [vmem:[#allocation2 + $0x120] sm:$0xff] %vm8, -inf
  %47 = vst.msk [vmem:[#allocation2 + $0x128] sm:$0xff] %vm8, -inf
  %48 = vst.msk [vmem:[#allocation2 + $0x130] sm:$0x3] %vm11, -inf
  %49 = vst.msk [vmem:[#allocation2 + $0x138] sm:$0xff] %vm8, -inf
  %50 = vst.msk [vmem:[#allocation2 + $0x140] sm:$0xff] %vm8, -inf
  %51 = vst.msk [vmem:[#allocation2 + $0x148] sm:$0x3] %vm11, -inf
  %52 = vst.msk [vmem:[#allocation2 + $0x150] sm:$0xff] %vm8, -inf
  %53 = vst.msk [vmem:[#allocation2 + $0x158] sm:$0xff] %vm8, -inf
  %54 = vst.msk [vmem:[#allocation2 + $0x160] sm:$0x3] %vm11, -inf
  %55 = vst.msk [vmem:[#allocation2 + $0x168] sm:$0xff] %vm8, -inf
  %56 = vst.msk [vmem:[#allocation2 + $0x170] sm:$0xff] %vm8, -inf
  %57 = vst.msk [vmem:[#allocation2 + $0x178] sm:$0x3] %vm11, -inf
  %58 = vst.msk [vmem:[#allocation2 + $0x180] sm:$0xff] %vm8, -inf
  %59 = vst.msk [vmem:[#allocation2 + $0x188] sm:$0xff] %vm8, -inf
  %60 = vst.msk [vmem:[#allocation2 + $0x190] sm:$0x3] %vm11, -inf
  %61 = vst.msk [vmem:[#allocation2 + $0x198] sm:$0xff] %vm8, -inf
  %62 = vst.msk [vmem:[#allocation2 + $0x1a0] sm:$0xff] %vm8, -inf
  %63 = vst.msk [vmem:[#allocation2 + $0x1a8] sm:$0x3] %vm11, -inf
  %64 = vst.msk [vmem:[#allocation2 + $0x1b0] sm:$0xff] %vm8, -inf
  %65 = vst.msk [vmem:[#allocation2 + $0x1b8] sm:$0xff] %vm8, -inf
  %66 = vst.msk [vmem:[#allocation2 + $0x1c0] sm:$0x3] %vm11, -inf
  %67 = vst.msk [vmem:[#allocation2 + $0x1c8] sm:$0xff] %vm8, -inf
  %68 = vst.msk [vmem:[#allocation2 + $0x1d0] sm:$0xff] %vm8, -inf
  %69 = vst.msk [vmem:[#allocation2 + $0x1d8] sm:$0x3] %vm11, -inf
  %70 = vst.msk [vmem:[#allocation2 + $0x1e0] sm:$0xff] %vm8, -inf
  %71 = vst.msk [vmem:[#allocation2 + $0x1e8] sm:$0xff] %vm8, -inf
  %72 = vst.msk [vmem:[#allocation2 + $0x1f0] sm:$0x3] %vm11, -inf
  %73 = vst.msk [vmem:[#allocation2 + $0x1f8] sm:$0xff] %vm8, -inf
  %74 = vst.msk [vmem:[#allocation2 + $0x200] sm:$0xff] %vm8, -inf
  %75 = vst.msk [vmem:[#allocation2 + $0x208] sm:$0x3] %vm11, -inf
  %76 = vst.msk [vmem:[#allocation2 + $0x210] sm:$0xff] %vm8, -inf
  %77 = vst.msk [vmem:[#allocation2 + $0x218] sm:$0xff] %vm8, -inf
  %78 = vst.msk [vmem:[#allocation2 + $0x220] sm:$0x3] %vm11, -inf
  %79 = vst.msk [vmem:[#allocation2 + $0x228] sm:$0xff] %vm8, -inf
  %80 = vst.msk [vmem:[#allocation2 + $0x230] sm:$0xff] %vm8, -inf
  %81 = vst.msk [vmem:[#allocation2 + $0x238] sm:$0x3] %vm11, -inf
  %82 = vst.msk [vmem:[#allocation2 + $0x240] sm:$0xff] %vm8, -inf
  %83 = vst.msk [vmem:[#allocation2 + $0x248] sm:$0xff] %vm8, -inf
  %84 = vst.msk [vmem:[#allocation2 + $0x250] sm:$0x3] %vm11, -inf
  %85 = vst.msk [vmem:[#allocation2 + $0x258] sm:$0xff] %vm8, -inf
  %86 = vst.msk [vmem:[#allocation2 + $0x260] sm:$0xff] %vm8, -inf
  %87 = vst.msk [vmem:[#allocation2 + $0x268] sm:$0x3] %vm11, -inf
  %88 = vst.msk [vmem:[#allocation2 + $0x270] sm:$0xff] %vm8, -inf
  %89 = vst.msk [vmem:[#allocation2 + $0x278] sm:$0xff] %vm8, -inf
  %90 = vst.msk [vmem:[#allocation2 + $0x280] sm:$0x3] %vm11, -inf
  %91 = vst.msk [vmem:[#allocation2 + $0x288] sm:$0xff] %vm8, -inf
  %92 = vst.msk [vmem:[#allocation2 + $0x290] sm:$0xff] %vm8, -inf
  %93 = vst.msk [vmem:[#allocation2 + $0x298] sm:$0x3] %vm11, -inf
  %94 = vst.msk [vmem:[#allocation2 + $0x2a0] sm:$0xff] %vm8, -inf
  %95 = vst.msk [vmem:[#allocation2 + $0x2a8] sm:$0xff] %vm8, -inf
  %96 = vst.msk [vmem:[#allocation2 + $0x2b0] sm:$0x3] %vm11, -inf
  %97 = vst.msk [vmem:[#allocation2 + $0x2b8] sm:$0xff] %vm8, -inf
  %98 = vst.msk [vmem:[#allocation2 + $0x2c0] sm:$0xff] %vm8, -inf
  %99 = vst.msk [vmem:[#allocation2 + $0x2c8] sm:$0x3] %vm11, -inf
  %100 = vst.msk [vmem:[#allocation2 + $0x2d0] sm:$0xff] %vm8, -inf
  %101 = vst.msk [vmem:[#allocation2 + $0x2d8] sm:$0xff] %vm8, -inf
  %102 = vst.msk [vmem:[#allocation2 + $0x2e0] sm:$0x3] %vm11, -inf
  %103 = vst.msk [vmem:[#allocation2 + $0x2e8] sm:$0xff] %vm8, -inf
  %104 = vst.msk [vmem:[#allocation2 + $0x2f0] sm:$0xff] %vm8, -inf
  %105 = vst.msk [vmem:[#allocation2 + $0x2f8] sm:$0x3] %vm11, -inf
  %106 = vst.msk [vmem:[#allocation2 + $0x300] sm:$0xff] %vm8, -inf
  %107 = vst.msk [vmem:[#allocation2 + $0x308] sm:$0xff] %vm8, -inf
  %108 = vst.msk [vmem:[#allocation2 + $0x310] sm:$0x3] %vm11, -inf
  %109 = vst.msk [vmem:[#allocation2 + $0x318] sm:$0xff] %vm8, -inf
  %110 = vst.msk [vmem:[#allocation2 + $0x320] sm:$0xff] %vm8, -inf
  %111 = vst.msk [vmem:[#allocation2 + $0x328] sm:$0x3] %vm11, -inf
  %112 = vst.msk [vmem:[#allocation2 + $0x330] sm:$0xff] %vm8, -inf
  %113 = vst.msk [vmem:[#allocation2 + $0x338] sm:$0xff] %vm8, -inf
  %114 = vst.msk [vmem:[#allocation2 + $0x340] sm:$0x3] %vm11, -inf
  %115 = vst.msk [vmem:[#allocation2 + $0x348] sm:$0xff] %vm8, -inf
  %116 = vst.msk [vmem:[#allocation2 + $0x350] sm:$0xff] %vm8, -inf
  %117 = vst.msk [vmem:[#allocation2 + $0x358] sm:$0x3] %vm11, -inf
  %v118 = vld [vmem:[%s0] sm:$0xff]
  %v119 = vld [vmem:[%s0 + $0x8] sm:$0xff]
  %v120 = vld [vmem:[%s0 + $0x10] sm:$0xff]
  %v121 = vld [vmem:[%s0 + $0x18] sm:$0xff]
  %v122 = vld [vmem:[%s0 + $0x20] sm:$0xff]
  %v123 = vld [vmem:[%s0 + $0x28] sm:$0xff]
  %v124 = vld [vmem:[%s0 + $0x30] sm:$0xff]
  %v125 = vld [vmem:[%s0 + $0x38] sm:$0xff]
  %v126 = vld [vmem:[%s0 + $0x40] sm:$0xff]
  %v127 = vld [vmem:[%s0 + $0x48] sm:$0xff]
  %v128 = vld [vmem:[%s0 + $0x50] sm:$0xff]
  %v129 = vld [vmem:[%s0 + $0x58] sm:$0xff]
  %v130 = vld [vmem:[%s0 + $0x60] sm:$0xff]
  %v131 = vld [vmem:[%s0 + $0x68] sm:$0xff]
  %v132 = vld [vmem:[%s0 + $0x70] sm:$0xff]
  %v133 = vld [vmem:[%s0 + $0x78] sm:$0xff]
  %v134 = vld [vmem:[%s0 + $0x80] sm:$0xff]
  %v135 = vld [vmem:[%s0 + $0x88] sm:$0xff]
  %v136 = vld [vmem:[%s0 + $0x90] sm:$0xff]
  %v137 = vld [vmem:[%s0 + $0x98] sm:$0xff]
  %v138 = vld [vmem:[%s0 + $0xa0] sm:$0xff]
  %v139 = vld [vmem:[%s0 + $0xa8] sm:$0xff]
  %v140 = vld [vmem:[%s0 + $0xb0] sm:$0xff]
  %v141 = vld [vmem:[%s0 + $0xb8] sm:$0xff]
  %v142 = vld [vmem:[%s0 + $0xc0] sm:$0xff]
  %v143 = vld [vmem:[%s0 + $0xc8] sm:$0xff]
  %v144 = vld [vmem:[%s0 + $0xd0] sm:$0xff]
  %v145 = vld [vmem:[%s0 + $0xd8] sm:$0xff]
  %v146 = vld [vmem:[%s0 + $0xe0] sm:$0xff]
  %v147 = vld [vmem:[%s0 + $0xe8] sm:$0xff]
  %v148 = vld [vmem:[%s0 + $0xf0] sm:$0xff]
  %v149 = vld [vmem:[%s0 + $0xf8] sm:$0xff]
  %v150 = vld [vmem:[%s0 + $0x100] sm:$0xff]
  %v151 = vld [vmem:[%s0 + $0x108] sm:$0xff]
  %v152 = vld [vmem:[%s0 + $0x110] sm:$0xff]
  %v153 = vld [vmem:[%s0 + $0x118] sm:$0xff]
  %v154 = vld [vmem:[%s0 + $0x120] sm:$0xff]
  %v155 = vld [vmem:[%s0 + $0x128] sm:$0xff]
  %v156 = vld [vmem:[%s0 + $0x130] sm:$0xff]
  %v157 = vld [vmem:[%s0 + $0x138] sm:$0xff]
  %v158 = vld [vmem:[%s0 + $0x140] sm:$0xff]
  %v159 = vld [vmem:[%s0 + $0x148] sm:$0xff]
  %v160 = vld [vmem:[%s0 + $0x150] sm:$0xff]
  %v161 = vld [vmem:[%s0 + $0x158] sm:$0xff]
  %v162 = vld [vmem:[%s0 + $0x160] sm:$0xff]
  %v163 = vld [vmem:[%s0 + $0x168] sm:$0xff]
  %v164 = vld [vmem:[%s0 + $0x170] sm:$0xff]
  %v165 = vld [vmem:[%s0 + $0x178] sm:$0xff]
  %v166 = vld [vmem:[%s0 + $0x180] sm:$0xff]
  %v167 = vld [vmem:[%s0 + $0x188] sm:$0xff]
  %v168 = vld [vmem:[%s0 + $0x190] sm:$0xff]
  %v169 = vld [vmem:[%s0 + $0x198] sm:$0xff]
  %v170 = vld [vmem:[%s0 + $0x1a0] sm:$0xff]
  %v171 = vld [vmem:[%s0 + $0x1a8] sm:$0xff]
  %v172 = vld [vmem:[%s0 + $0x1b0] sm:$0xff]
  %v173 = vld [vmem:[%s0 + $0x1b8] sm:$0xff]
  %v174 = vld [vmem:[%s0 + $0x1c0] sm:$0xff]
  %v175 = vld [vmem:[%s0 + $0x1c8] sm:$0xff]
  %v176 = vld [vmem:[%s0 + $0x1d0] sm:$0xff]
  %v177 = vld [vmem:[%s0 + $0x1d8] sm:$0xff]
  %v178 = vld [vmem:[%s0 + $0x1e0] sm:$0xff]
  %v179 = vld [vmem:[%s0 + $0x1e8] sm:$0xff]
  %v180 = vld [vmem:[%s0 + $0x1f0] sm:$0xff]
  %v181 = vld [vmem:[%s0 + $0x1f8] sm:$0xff]
  %s182 = scalar_lea.vmem [#allocation2], 24
  %183 = vst.msk [vmem:[%s182 + $0x1] sm:$0xff] %vm8, %v118
  %184 = vst.msk [vmem:[%s182 + $0x9] sm:$0xff] %vm8, %v119
  %185 = vst.msk [vmem:[%s182 + $0x19] sm:$0xff] %vm8, %v120
  %186 = vst.msk [vmem:[%s182 + $0x21] sm:$0xff] %vm8, %v121
  %187 = vst.msk [vmem:[%s182 + $0x31] sm:$0xff] %vm8, %v122
  %188 = vst.msk [vmem:[%s182 + $0x39] sm:$0xff] %vm8, %v123
  %189 = vst.msk [vmem:[%s182 + $0x49] sm:$0xff] %vm8, %v124
  %190 = vst.msk [vmem:[%s182 + $0x51] sm:$0xff] %vm8, %v125
  %191 = vst.msk [vmem:[%s182 + $0x61] sm:$0xff] %vm8, %v126
  %192 = vst.msk [vmem:[%s182 + $0x69] sm:$0xff] %vm8, %v127
  %193 = vst.msk [vmem:[%s182 + $0x79] sm:$0xff] %vm8, %v128
  %194 = vst.msk [vmem:[%s182 + $0x81] sm:$0xff] %vm8, %v129
  %195 = vst.msk [vmem:[%s182 + $0x91] sm:$0xff] %vm8, %v130
  %196 = vst.msk [vmem:[%s182 + $0x99] sm:$0xff] %vm8, %v131
  %197 = vst.msk [vmem:[%s182 + $0xa9] sm:$0xff] %vm8, %v132
  %198 = vst.msk [vmem:[%s182 + $0xb1] sm:$0xff] %vm8, %v133
  %199 = vst.msk [vmem:[%s182 + $0xc1] sm:$0xff] %vm8, %v134
  %200 = vst.msk [vmem:[%s182 + $0xc9] sm:$0xff] %vm8, %v135
  %201 = vst.msk [vmem:[%s182 + $0xd9] sm:$0xff] %vm8, %v136
  %202 = vst.msk [vmem:[%s182 + $0xe1] sm:$0xff] %vm8, %v137
  %203 = vst.msk [vmem:[%s182 + $0xf1] sm:$0xff] %vm8, %v138
  %204 = vst.msk [vmem:[%s182 + $0xf9] sm:$0xff] %vm8, %v139
  %205 = vst.msk [vmem:[%s182 + $0x109] sm:$0xff] %vm8, %v140
  %206 = vst.msk [vmem:[%s182 + $0x111] sm:$0xff] %vm8, %v141
  %207 = vst.msk [vmem:[%s182 + $0x121] sm:$0xff] %vm8, %v142
  %208 = vst.msk [vmem:[%s182 + $0x129] sm:$0xff] %vm8, %v143
  %209 = vst.msk [vmem:[%s182 + $0x139] sm:$0xff] %vm8, %v144
  %210 = vst.msk [vmem:[%s182 + $0x141] sm:$0xff] %vm8, %v145
  %211 = vst.msk [vmem:[%s182 + $0x151] sm:$0xff] %vm8, %v146
  %212 = vst.msk [vmem:[%s182 + $0x159] sm:$0xff] %vm8, %v147
  %213 = vst.msk [vmem:[%s182 + $0x169] sm:$0xff] %vm8, %v148
  %214 = vst.msk [vmem:[%s182 + $0x171] sm:$0xff] %vm8, %v149
  %215 = vst.msk [vmem:[%s182 + $0x1b1] sm:$0xff] %vm8, %v150
  %216 = vst.msk [vmem:[%s182 + $0x1b9] sm:$0xff] %vm8, %v151
  %217 = vst.msk [vmem:[%s182 + $0x1c9] sm:$0xff] %vm8, %v152
  %218 = vst.msk [vmem:[%s182 + $0x1d1] sm:$0xff] %vm8, %v153
  %219 = vst.msk [vmem:[%s182 + $0x1e1] sm:$0xff] %vm8, %v154
  %220 = vst.msk [vmem:[%s182 + $0x1e9] sm:$0xff] %vm8, %v155
  %221 = vst.msk [vmem:[%s182 + $0x1f9] sm:$0xff] %vm8, %v156
  %222 = vst.msk [vmem:[%s182 + $0x201] sm:$0xff] %vm8, %v157
  %223 = vst.msk [vmem:[%s182 + $0x211] sm:$0xff] %vm8, %v158
  %224 = vst.msk [vmem:[%s182 + $0x219] sm:$0xff] %vm8, %v159
  %225 = vst.msk [vmem:[%s182 + $0x229] sm:$0xff] %vm8, %v160
  %226 = vst.msk [vmem:[%s182 + $0x231] sm:$0xff] %vm8, %v161
  %227 = vst.msk [vmem:[%s182 + $0x241] sm:$0xff] %vm8, %v162
  %228 = vst.msk [vmem:[%s182 + $0x249] sm:$0xff] %vm8, %v163
  %229 = vst.msk [vmem:[%s182 + $0x259] sm:$0xff] %vm8, %v164
  %230 = vst.msk [vmem:[%s182 + $0x261] sm:$0xff] %vm8, %v165
  %231 = vst.msk [vmem:[%s182 + $0x271] sm:$0xff] %vm8, %v166
  %232 = vst.msk [vmem:[%s182 + $0x279] sm:$0xff] %vm8, %v167
  %233 = vst.msk [vmem:[%s182 + $0x289] sm:$0xff] %vm8, %v168
  %234 = vst.msk [vmem:[%s182 + $0x291] sm:$0xff] %vm8, %v169
  %235 = vst.msk [vmem:[%s182 + $0x2a1] sm:$0xff] %vm8, %v170
  %236 = vst.msk [vmem:[%s182 + $0x2a9] sm:$0xff] %vm8, %v171
  %237 = vst.msk [vmem:[%s182 + $0x2b9] sm:$0xff] %vm8, %v172
  %238 = vst.msk [vmem:[%s182 + $0x2c1] sm:$0xff] %vm8, %v173
  %239 = vst.msk [vmem:[%s182 + $0x2d1] sm:$0xff] %vm8, %v174
  %240 = vst.msk [vmem:[%s182 + $0x2d9] sm:$0xff] %vm8, %v175
  %241 = vst.msk [vmem:[%s182 + $0x2e9] sm:$0xff] %vm8, %v176
  %242 = vst.msk [vmem:[%s182 + $0x2f1] sm:$0xff] %vm8, %v177
  %243 = vst.msk [vmem:[%s182 + $0x301] sm:$0xff] %vm8, %v178
  %244 = vst.msk [vmem:[%s182 + $0x309] sm:$0xff] %vm8, %v179
  %245 = vst.msk [vmem:[%s182 + $0x319] sm:$0xff] %vm8, %v180
  %246 = vst.msk [vmem:[%s182 + $0x321] sm:$0xff] %vm8, %v181
  %v247 = vld [vmem:[#allocation2] ss:$2 sm:$0xff]
  %s248 = scalar_lea.vmem [#allocation2], 48
  %v249 = vld [vmem:[%s248] ss:$2 sm:$0xff]
  %s250 = scalar_lea.vmem [#allocation2], 96
  %v251 = vld [vmem:[%s250] ss:$2 sm:$0xff]
  %s252 = scalar_lea.vmem [#allocation2], 144
  %v253 = vld [vmem:[%s252] ss:$2 sm:$0xff]
  %s254 = scalar_lea.vmem [#allocation2], 192
  %v255 = vld [vmem:[%s254] ss:$2 sm:$0xff]
  %s256 = scalar_lea.vmem [#allocation2], 240
  %v257 = vld [vmem:[%s256] ss:$2 sm:$0xff]
  %s258 = scalar_lea.vmem [#allocation2], 288
  %v259 = vld [vmem:[%s258] ss:$2 sm:$0xff]
  %s260 = scalar_lea.vmem [#allocation2], 336
  %v261 = vld [vmem:[%s260] ss:$2 sm:$0xff]
  %s262 = scalar_lea.vmem [#allocation2], 432
  %v263 = vld [vmem:[%s262] ss:$2 sm:$0xff]
  %s264 = scalar_lea.vmem [#allocation2], 480
  %v265 = vld [vmem:[%s264] ss:$2 sm:$0xff]
  %s266 = scalar_lea.vmem [#allocation2], 528
  %v267 = vld [vmem:[%s266] ss:$2 sm:$0xff]
  %s268 = scalar_lea.vmem [#allocation2], 576
  %v269 = vld [vmem:[%s268] ss:$2 sm:$0xff]
  %s270 = scalar_lea.vmem [#allocation2], 624
  %v271 = vld [vmem:[%s270] ss:$2 sm:$0xff]
  %s272 = scalar_lea.vmem [#allocation2], 672
  %v273 = vld [vmem:[%s272] ss:$2 sm:$0xff]
  %s274 = scalar_lea.vmem [#allocation2], 720
  %v275 = vld [vmem:[%s274] ss:$2 sm:$0xff]
  %s276 = scalar_lea.vmem [#allocation2], 768
  %v277 = vld [vmem:[%s276] ss:$2 sm:$0xff]
  %s278 = scalar_lea.vmem [#allocation2], 1
  %v279 = vld [vmem:[%s278] ss:$2 sm:$0xff]
  %s280 = scalar_lea.vmem [#allocation2], 49
  %v281 = vld [vmem:[%s280] ss:$2 sm:$0xff]
  %s282 = scalar_lea.vmem [#allocation2], 97
  %v283 = vld [vmem:[%s282] ss:$2 sm:$0xff]
  %s284 = scalar_lea.vmem [#allocation2], 145
  %v285 = vld [vmem:[%s284] ss:$2 sm:$0xff]
  %s286 = scalar_lea.vmem [#allocation2], 193
  %v287 = vld [vmem:[%s286] ss:$2 sm:$0xff]
  %s288 = scalar_lea.vmem [#allocation2], 241
  %v289 = vld [vmem:[%s288] ss:$2 sm:$0xff]
  %s290 = scalar_lea.vmem [#allocation2], 289
  %v291 = vld [vmem:[%s290] ss:$2 sm:$0xff]
  %s292 = scalar_lea.vmem [#allocation2], 337
  %v293 = vld [vmem:[%s292] ss:$2 sm:$0xff]
  %s294 = scalar_lea.vmem [#allocation2], 433
  %v295 = vld [vmem:[%s294] ss:$2 sm:$0xff]
  %s296 = scalar_lea.vmem [#allocation2], 481
  %v297 = vld [vmem:[%s296] ss:$2 sm:$0xff]
  %s298 = scalar_lea.vmem [#allocation2], 529
  %v299 = vld [vmem:[%s298] ss:$2 sm:$0xff]
  %s300 = scalar_lea.vmem [#allocation2], 577
  %v301 = vld [vmem:[%s300] ss:$2 sm:$0xff]
  %s302 = scalar_lea.vmem [#allocation2], 625
  %v303 = vld [vmem:[%s302] ss:$2 sm:$0xff]
  %s304 = scalar_lea.vmem [#allocation2], 673
  %v305 = vld [vmem:[%s304] ss:$2 sm:$0xff]
  %s306 = scalar_lea.vmem [#allocation2], 721
  %v307 = vld [vmem:[%s306] ss:$2 sm:$0xff]
  %s308 = scalar_lea.vmem [#allocation2], 769
  %v309 = vld [vmem:[%s308] ss:$2 sm:$0xff]
  %v310 = vmax.f32 %v247, %v279
  %v311 = vmax.f32 %v249, %v281
  %v312 = vmax.f32 %v251, %v283
  %v313 = vmax.f32 %v253, %v285
  %v314 = vmax.f32 %v255, %v287
  %v315 = vmax.f32 %v257, %v289
  %v316 = vmax.f32 %v259, %v291
  %v317 = vmax.f32 %v261, %v293
  %v318 = vmax.f32 %v263, %v295
  %v319 = vmax.f32 %v265, %v297
  %v320 = vmax.f32 %v267, %v299
  %v321 = vmax.f32 %v269, %v301
  %v322 = vmax.f32 %v271, %v303
  %v323 = vmax.f32 %v273, %v305
  %v324 = vmax.f32 %v275, %v307
  %v325 = vmax.f32 %v277, %v309
  %s326 = scalar_lea.vmem [#allocation2], 2
  %v327 = vld [vmem:[%s326] ss:$2 sm:$0xff]
  %s328 = scalar_lea.vmem [#allocation2], 50
  %v329 = vld [vmem:[%s328] ss:$2 sm:$0xff]
  %s330 = scalar_lea.vmem [#allocation2], 98
  %v331 = vld [vmem:[%s330] ss:$2 sm:$0xff]
  %s332 = scalar_lea.vmem [#allocation2], 146
  %v333 = vld [vmem:[%s332] ss:$2 sm:$0xff]
  %s334 = scalar_lea.vmem [#allocation2], 194
  %v335 = vld [vmem:[%s334] ss:$2 sm:$0xff]
  %s336 = scalar_lea.vmem [#allocation2], 242
  %v337 = vld [vmem:[%s336] ss:$2 sm:$0xff]
  %s338 = scalar_lea.vmem [#allocation2], 290
  %v339 = vld [vmem:[%s338] ss:$2 sm:$0xff]
  %s340 = scalar_lea.vmem [#allocation2], 338
  %v341 = vld [vmem:[%s340] ss:$2 sm:$0xff]
  %s342 = scalar_lea.vmem [#allocation2], 434
  %v343 = vld [vmem:[%s342] ss:$2 sm:$0xff]
  %s344 = scalar_lea.vmem [#allocation2], 482
  %v345 = vld [vmem:[%s344] ss:$2 sm:$0xff]
  %s346 = scalar_lea.vmem [#allocation2], 530
  %v347 = vld [vmem:[%s346] ss:$2 sm:$0xff]
  %s348 = scalar_lea.vmem [#allocation2], 578
  %v349 = vld [vmem:[%s348] ss:$2 sm:$0xff]
  %s350 = scalar_lea.vmem [#allocation2], 626
  %v351 = vld [vmem:[%s350] ss:$2 sm:$0xff]
  %s352 = scalar_lea.vmem [#allocation2], 674
  %v353 = vld [vmem:[%s352] ss:$2 sm:$0xff]
  %s354 = scalar_lea.vmem [#allocation2], 722
  %v355 = vld [vmem:[%s354] ss:$2 sm:$0xff]
  %s356 = scalar_lea.vmem [#allocation2], 770
  %v357 = vld [vmem:[%s356] ss:$2 sm:$0xff]
  %v358 = vmax.f32 %v310, %v327
  %v359 = vmax.f32 %v311, %v329
  %v360 = vmax.f32 %v312, %v331
  %v361 = vmax.f32 %v313, %v333
  %v362 = vmax.f32 %v314, %v335
  %v363 = vmax.f32 %v315, %v337
  %v364 = vmax.f32 %v316, %v339
  %v365 = vmax.f32 %v317, %v341
  %v366 = vmax.f32 %v318, %v343
  %v367 = vmax.f32 %v319, %v345
  %v368 = vmax.f32 %v320, %v347
  %v369 = vmax.f32 %v321, %v349
  %v370 = vmax.f32 %v322, %v351
  %v371 = vmax.f32 %v323, %v353
  %v372 = vmax.f32 %v324, %v355
  %v373 = vmax.f32 %v325, %v357
  %v374 = vld [vmem:[%s182] ss:$2 sm:$0xff]
  %s375 = scalar_lea.vmem %s182, 48 [#allocation2]
  %v376 = vld [vmem:[%s375] ss:$2 sm:$0xff]
  %s377 = scalar_lea.vmem %s182, 96 [#allocation2]
  %v378 = vld [vmem:[%s377] ss:$2 sm:$0xff]
  %s379 = scalar_lea.vmem %s182, 144 [#allocation2]
  %v380 = vld [vmem:[%s379] ss:$2 sm:$0xff]
  %s381 = scalar_lea.vmem %s182, 192 [#allocation2]
  %v382 = vld [vmem:[%s381] ss:$2 sm:$0xff]
  %s383 = scalar_lea.vmem %s182, 240 [#allocation2]
  %v384 = vld [vmem:[%s383] ss:$2 sm:$0xff]
  %s385 = scalar_lea.vmem %s182, 288 [#allocation2]
  %v386 = vld [vmem:[%s385] ss:$2 sm:$0xff]
  %s387 = scalar_lea.vmem %s182, 336 [#allocation2]
  %v388 = vld [vmem:[%s387] ss:$2 sm:$0xff]
  %s389 = scalar_lea.vmem %s182, 432 [#allocation2]
  %v390 = vld [vmem:[%s389] ss:$2 sm:$0xff]
  %s391 = scalar_lea.vmem %s182, 480 [#allocation2]
  %v392 = vld [vmem:[%s391] ss:$2 sm:$0xff]
  %s393 = scalar_lea.vmem %s182, 528 [#allocation2]
  %v394 = vld [vmem:[%s393] ss:$2 sm:$0xff]
  %s395 = scalar_lea.vmem %s182, 576 [#allocation2]
  %v396 = vld [vmem:[%s395] ss:$2 sm:$0xff]
  %s397 = scalar_lea.vmem %s182, 624 [#allocation2]
  %v398 = vld [vmem:[%s397] ss:$2 sm:$0xff]
  %s399 = scalar_lea.vmem %s182, 672 [#allocation2]
  %v400 = vld [vmem:[%s399] ss:$2 sm:$0xff]
  %s401 = scalar_lea.vmem %s182, 720 [#allocation2]
  %v402 = vld [vmem:[%s401] ss:$2 sm:$0xff]
  %s403 = scalar_lea.vmem %s182, 768 [#allocation2]
  %v404 = vld [vmem:[%s403] ss:$2 sm:$0xff]
  %v405 = vmax.f32 %v358, %v374
  %v406 = vmax.f32 %v359, %v376
  %v407 = vmax.f32 %v360, %v378
  %v408 = vmax.f32 %v361, %v380
  %v409 = vmax.f32 %v362, %v382
  %v410 = vmax.f32 %v363, %v384
  %v411 = vmax.f32 %v364, %v386
  %v412 = vmax.f32 %v365, %v388
  %v413 = vmax.f32 %v366, %v390
  %v414 = vmax.f32 %v367, %v392
  %v415 = vmax.f32 %v368, %v394
  %v416 = vmax.f32 %v369, %v396
  %v417 = vmax.f32 %v370, %v398
  %v418 = vmax.f32 %v371, %v400
  %v419 = vmax.f32 %v372, %v402
  %v420 = vmax.f32 %v373, %v404
  %s421 = scalar_lea.vmem %s182, 1 [#allocation2]
  %v422 = vld [vmem:[%s421] ss:$2 sm:$0xff]
  %s423 = scalar_lea.vmem %s182, 49 [#allocation2]
  %v424 = vld [vmem:[%s423] ss:$2 sm:$0xff]
  %s425 = scalar_lea.vmem %s182, 97 [#allocation2]
  %v426 = vld [vmem:[%s425] ss:$2 sm:$0xff]
  %s427 = scalar_lea.vmem %s182, 145 [#allocation2]
  %v428 = vld [vmem:[%s427] ss:$2 sm:$0xff]
  %s429 = scalar_lea.vmem %s182, 193 [#allocation2]
  %v430 = vld [vmem:[%s429] ss:$2 sm:$0xff]
  %s431 = scalar_lea.vmem %s182, 241 [#allocation2]
  %v432 = vld [vmem:[%s431] ss:$2 sm:$0xff]
  %s433 = scalar_lea.vmem %s182, 289 [#allocation2]
  %v434 = vld [vmem:[%s433] ss:$2 sm:$0xff]
  %s435 = scalar_lea.vmem %s182, 337 [#allocation2]
  %v436 = vld [vmem:[%s435] ss:$2 sm:$0xff]
  %s437 = scalar_lea.vmem %s182, 433 [#allocation2]
  %v438 = vld [vmem:[%s437] ss:$2 sm:$0xff]
  %s439 = scalar_lea.vmem %s182, 481 [#allocation2]
  %v440 = vld [vmem:[%s439] ss:$2 sm:$0xff]
  %s441 = scalar_lea.vmem %s182, 529 [#allocation2]
  %v442 = vld [vmem:[%s441] ss:$2 sm:$0xff]
  %s443 = scalar_lea.vmem %s182, 577 [#allocation2]
  %v444 = vld [vmem:[%s443] ss:$2 sm:$0xff]
  %s445 = scalar_lea.vmem %s182, 625 [#allocation2]
  %v446 = vld [vmem:[%s445] ss:$2 sm:$0xff]
  %s447 = scalar_lea.vmem %s182, 673 [#allocation2]
  %v448 = vld [vmem:[%s447] ss:$2 sm:$0xff]
  %s449 = scalar_lea.vmem %s182, 721 [#allocation2]
  %v450 = vld [vmem:[%s449] ss:$2 sm:$0xff]
  %s451 = scalar_lea.vmem %s182, 769 [#allocation2]
  %v452 = vld [vmem:[%s451] ss:$2 sm:$0xff]
  %v453 = vmax.f32 %v405, %v422
  %v454 = vmax.f32 %v406, %v424
  %v455 = vmax.f32 %v407, %v426
  %v456 = vmax.f32 %v408, %v428
  %v457 = vmax.f32 %v409, %v430
  %v458 = vmax.f32 %v410, %v432
  %v459 = vmax.f32 %v411, %v434
  %v460 = vmax.f32 %v412, %v436
  %v461 = vmax.f32 %v413, %v438
  %v462 = vmax.f32 %v414, %v440
  %v463 = vmax.f32 %v415, %v442
  %v464 = vmax.f32 %v416, %v444
  %v465 = vmax.f32 %v417, %v446
  %v466 = vmax.f32 %v418, %v448
  %v467 = vmax.f32 %v419, %v450
  %v468 = vmax.f32 %v420, %v452
  %s469 = scalar_lea.vmem %s182, 2 [#allocation2]
  %v470 = vld [vmem:[%s469] ss:$2 sm:$0xff]
  %s471 = scalar_lea.vmem %s182, 50 [#allocation2]
  %v472 = vld [vmem:[%s471] ss:$2 sm:$0xff]
  %s473 = scalar_lea.vmem %s182, 98 [#allocation2]
  %v474 = vld [vmem:[%s473] ss:$2 sm:$0xff]
  %s475 = scalar_lea.vmem %s182, 146 [#allocation2]
  %v476 = vld [vmem:[%s475] ss:$2 sm:$0xff]
  %s477 = scalar_lea.vmem %s182, 194 [#allocation2]
  %v478 = vld [vmem:[%s477] ss:$2 sm:$0xff]
  %s479 = scalar_lea.vmem %s182, 242 [#allocation2]
  %v480 = vld [vmem:[%s479] ss:$2 sm:$0xff]
  %s481 = scalar_lea.vmem %s182, 290 [#allocation2]
  %v482 = vld [vmem:[%s481] ss:$2 sm:$0xff]
  %s483 = scalar_lea.vmem %s182, 338 [#allocation2]
  %v484 = vld [vmem:[%s483] ss:$2 sm:$0xff]
  %s485 = scalar_lea.vmem %s182, 434 [#allocation2]
  %v486 = vld [vmem:[%s485] ss:$2 sm:$0xff]
  %s487 = scalar_lea.vmem %s182, 482 [#allocation2]
  %v488 = vld [vmem:[%s487] ss:$2 sm:$0xff]
  %s489 = scalar_lea.vmem %s182, 530 [#allocation2]
  %v490 = vld [vmem:[%s489] ss:$2 sm:$0xff]
  %s491 = scalar_lea.vmem %s182, 578 [#allocation2]
  %v492 = vld [vmem:[%s491] ss:$2 sm:$0xff]
  %s493 = scalar_lea.vmem %s182, 626 [#allocation2]
  %v494 = vld [vmem:[%s493] ss:$2 sm:$0xff]
  %s495 = scalar_lea.vmem %s182, 674 [#allocation2]
  %v496 = vld [vmem:[%s495] ss:$2 sm:$0xff]
  %s497 = scalar_lea.vmem %s182, 722 [#allocation2]
  %v498 = vld [vmem:[%s497] ss:$2 sm:$0xff]
  %s499 = scalar_lea.vmem %s182, 770 [#allocation2]
  %v500 = vld [vmem:[%s499] ss:$2 sm:$0xff]
  %v501 = vmax.f32 %v453, %v470
  %v502 = vmax.f32 %v454, %v472
  %v503 = vmax.f32 %v455, %v474
  %v504 = vmax.f32 %v456, %v476
  %v505 = vmax.f32 %v457, %v478
  %v506 = vmax.f32 %v458, %v480
  %v507 = vmax.f32 %v459, %v482
  %v508 = vmax.f32 %v460, %v484
  %v509 = vmax.f32 %v461, %v486
  %v510 = vmax.f32 %v462, %v488
  %v511 = vmax.f32 %v463, %v490
  %v512 = vmax.f32 %v464, %v492
  %v513 = vmax.f32 %v465, %v494
  %v514 = vmax.f32 %v466, %v496
  %v515 = vmax.f32 %v467, %v498
  %v516 = vmax.f32 %v468, %v500
  %s517 = scalar_lea.vmem [#allocation2], 48
  %v518 = vld [vmem:[%s517] ss:$2 sm:$0xff]
  %s519 = scalar_lea.vmem %s517, 48 [#allocation2]
  %v520 = vld [vmem:[%s519] ss:$2 sm:$0xff]
  %s521 = scalar_lea.vmem %s517, 96 [#allocation2]
  %v522 = vld [vmem:[%s521] ss:$2 sm:$0xff]
  %s523 = scalar_lea.vmem %s517, 144 [#allocation2]
  %v524 = vld [vmem:[%s523] ss:$2 sm:$0xff]
  %s525 = scalar_lea.vmem %s517, 192 [#allocation2]
  %v526 = vld [vmem:[%s525] ss:$2 sm:$0xff]
  %s527 = scalar_lea.vmem %s517, 240 [#allocation2]
  %v528 = vld [vmem:[%s527] ss:$2 sm:$0xff]
  %s529 = scalar_lea.vmem %s517, 288 [#allocation2]
  %v530 = vld [vmem:[%s529] ss:$2 sm:$0xff]
  %s531 = scalar_lea.vmem %s517, 336 [#allocation2]
  %v532 = vld [vmem:[%s531] ss:$2 sm:$0xff]
  %s533 = scalar_lea.vmem %s517, 432 [#allocation2]
  %v534 = vld [vmem:[%s533] ss:$2 sm:$0xff]
  %s535 = scalar_lea.vmem %s517, 480 [#allocation2]
  %v536 = vld [vmem:[%s535] ss:$2 sm:$0xff]
  %s537 = scalar_lea.vmem %s517, 528 [#allocation2]
  %v538 = vld [vmem:[%s537] ss:$2 sm:$0xff]
  %s539 = scalar_lea.vmem %s517, 576 [#allocation2]
  %v540 = vld [vmem:[%s539] ss:$2 sm:$0xff]
  %s541 = scalar_lea.vmem %s517, 624 [#allocation2]
  %v542 = vld [vmem:[%s541] ss:$2 sm:$0xff]
  %s543 = scalar_lea.vmem %s517, 672 [#allocation2]
  %v544 = vld [vmem:[%s543] ss:$2 sm:$0xff]
  %s545 = scalar_lea.vmem %s517, 720 [#allocation2]
  %v546 = vld [vmem:[%s545] ss:$2 sm:$0xff]
  %s547 = scalar_lea.vmem %s517, 768 [#allocation2]
  %v548 = vld [vmem:[%s547] ss:$2 sm:$0xff]
  %v549 = vmax.f32 %v501, %v518
  %v550 = vmax.f32 %v502, %v520
  %v551 = vmax.f32 %v503, %v522
  %v552 = vmax.f32 %v504, %v524
  %v553 = vmax.f32 %v505, %v526
  %v554 = vmax.f32 %v506, %v528
  %v555 = vmax.f32 %v507, %v530
  %v556 = vmax.f32 %v508, %v532
  %v557 = vmax.f32 %v509, %v534
  %v558 = vmax.f32 %v510, %v536
  %v559 = vmax.f32 %v511, %v538
  %v560 = vmax.f32 %v512, %v540
  %v561 = vmax.f32 %v513, %v542
  %v562 = vmax.f32 %v514, %v544
  %v563 = vmax.f32 %v515, %v546
  %v564 = vmax.f32 %v516, %v548
  %s565 = scalar_lea.vmem %s517, 1 [#allocation2]
  %v566 = vld [vmem:[%s565] ss:$2 sm:$0xff]
  %s567 = scalar_lea.vmem %s517, 49 [#allocation2]
  %v568 = vld [vmem:[%s567] ss:$2 sm:$0xff]
  %s569 = scalar_lea.vmem %s517, 97 [#allocation2]
  %v570 = vld [vmem:[%s569] ss:$2 sm:$0xff]
  %s571 = scalar_lea.vmem %s517, 145 [#allocation2]
  %v572 = vld [vmem:[%s571] ss:$2 sm:$0xff]
  %s573 = scalar_lea.vmem %s517, 193 [#allocation2]
  %v574 = vld [vmem:[%s573] ss:$2 sm:$0xff]
  %s575 = scalar_lea.vmem %s517, 241 [#allocation2]
  %v576 = vld [vmem:[%s575] ss:$2 sm:$0xff]
  %s577 = scalar_lea.vmem %s517, 289 [#allocation2]
  %v578 = vld [vmem:[%s577] ss:$2 sm:$0xff]
  %s579 = scalar_lea.vmem %s517, 337 [#allocation2]
  %v580 = vld [vmem:[%s579] ss:$2 sm:$0xff]
  %s581 = scalar_lea.vmem %s517, 433 [#allocation2]
  %v582 = vld [vmem:[%s581] ss:$2 sm:$0xff]
  %s583 = scalar_lea.vmem %s517, 481 [#allocation2]
  %v584 = vld [vmem:[%s583] ss:$2 sm:$0xff]
  %s585 = scalar_lea.vmem %s517, 529 [#allocation2]
  %v586 = vld [vmem:[%s585] ss:$2 sm:$0xff]
  %s587 = scalar_lea.vmem %s517, 577 [#allocation2]
  %v588 = vld [vmem:[%s587] ss:$2 sm:$0xff]
  %s589 = scalar_lea.vmem %s517, 625 [#allocation2]
  %v590 = vld [vmem:[%s589] ss:$2 sm:$0xff]
  %s591 = scalar_lea.vmem %s517, 673 [#allocation2]
  %v592 = vld [vmem:[%s591] ss:$2 sm:$0xff]
  %s593 = scalar_lea.vmem %s517, 721 [#allocation2]
  %v594 = vld [vmem:[%s593] ss:$2 sm:$0xff]
  %s595 = scalar_lea.vmem %s517, 769 [#allocation2]
  %v596 = vld [vmem:[%s595] ss:$2 sm:$0xff]
  %v597 = vmax.f32 %v549, %v566
  %v598 = vmax.f32 %v550, %v568
  %v599 = vmax.f32 %v551, %v570
  %v600 = vmax.f32 %v552, %v572
  %v601 = vmax.f32 %v553, %v574
  %v602 = vmax.f32 %v554, %v576
  %v603 = vmax.f32 %v555, %v578
  %v604 = vmax.f32 %v556, %v580
  %v605 = vmax.f32 %v557, %v582
  %v606 = vmax.f32 %v558, %v584
  %v607 = vmax.f32 %v559, %v586
  %v608 = vmax.f32 %v560, %v588
  %v609 = vmax.f32 %v561, %v590
  %v610 = vmax.f32 %v562, %v592
  %v611 = vmax.f32 %v563, %v594
  %v612 = vmax.f32 %v564, %v596
  %s613 = scalar_lea.vmem %s517, 2 [#allocation2]
  %v614 = vld [vmem:[%s613] ss:$2 sm:$0xff]
  %s615 = scalar_lea.vmem %s517, 50 [#allocation2]
  %v616 = vld [vmem:[%s615] ss:$2 sm:$0xff]
  %s617 = scalar_lea.vmem %s517, 98 [#allocation2]
  %v618 = vld [vmem:[%s617] ss:$2 sm:$0xff]
  %s619 = scalar_lea.vmem %s517, 146 [#allocation2]
  %v620 = vld [vmem:[%s619] ss:$2 sm:$0xff]
  %s621 = scalar_lea.vmem %s517, 194 [#allocation2]
  %v622 = vld [vmem:[%s621] ss:$2 sm:$0xff]
  %s623 = scalar_lea.vmem %s517, 242 [#allocation2]
  %v624 = vld [vmem:[%s623] ss:$2 sm:$0xff]
  %s625 = scalar_lea.vmem %s517, 290 [#allocation2]
  %v626 = vld [vmem:[%s625] ss:$2 sm:$0xff]
  %s627 = scalar_lea.vmem %s517, 338 [#allocation2]
  %v628 = vld [vmem:[%s627] ss:$2 sm:$0xff]
  %s629 = scalar_lea.vmem %s517, 434 [#allocation2]
  %v630 = vld [vmem:[%s629] ss:$2 sm:$0xff]
  %s631 = scalar_lea.vmem %s517, 482 [#allocation2]
  %v632 = vld [vmem:[%s631] ss:$2 sm:$0xff]
  %s633 = scalar_lea.vmem %s517, 530 [#allocation2]
  %v634 = vld [vmem:[%s633] ss:$2 sm:$0xff]
  %s635 = scalar_lea.vmem %s517, 578 [#allocation2]
  %v636 = vld [vmem:[%s635] ss:$2 sm:$0xff]
  %s637 = scalar_lea.vmem %s517, 626 [#allocation2]
  %v638 = vld [vmem:[%s637] ss:$2 sm:$0xff]
  %s639 = scalar_lea.vmem %s517, 674 [#allocation2]
  %v640 = vld [vmem:[%s639] ss:$2 sm:$0xff]
  %s641 = scalar_lea.vmem %s517, 722 [#allocation2]
  %v642 = vld [vmem:[%s641] ss:$2 sm:$0xff]
  %s643 = scalar_lea.vmem %s517, 770 [#allocation2]
  %v644 = vld [vmem:[%s643] ss:$2 sm:$0xff]
  %v645 = vmax.f32 %v597, %v614
  %v646 = vmax.f32 %v598, %v616
  %v647 = vmax.f32 %v599, %v618
  %v648 = vmax.f32 %v600, %v620
  %v649 = vmax.f32 %v601, %v622
  %v650 = vmax.f32 %v602, %v624
  %v651 = vmax.f32 %v603, %v626
  %v652 = vmax.f32 %v604, %v628
  %v653 = vmax.f32 %v605, %v630
  %v654 = vmax.f32 %v606, %v632
  %v655 = vmax.f32 %v607, %v634
  %v656 = vmax.f32 %v608, %v636
  %v657 = vmax.f32 %v609, %v638
  %v658 = vmax.f32 %v610, %v640
  %v659 = vmax.f32 %v611, %v642
  %v660 = vmax.f32 %v612, %v644
  %v661 = vsel %vm8, %v645, 0.0
  %v662 = vsel %vm8, %v646, 0.0
  %v663 = vadd.f32 %v661, %v662
  %v664 = vsel %vm8, %v647, 0.0
  %v665 = vadd.f32 %v663, %v664
  %v666 = vsel %vm8, %v648, 0.0
  %v667 = vadd.f32 %v665, %v666
  %v668 = vsel %vm8, %v649, 0.0
  %v669 = vadd.f32 %v667, %v668
  %v670 = vsel %vm8, %v650, 0.0
  %v671 = vadd.f32 %v669, %v670
  %v672 = vsel %vm8, %v651, 0.0
  %v673 = vadd.f32 %v671, %v672
  %v674 = vsel %vm8, %v652, 0.0
  %v675 = vadd.f32 %v673, %v674
  %v676 = vsel %vm8, %v653, 0.0
  %v677 = vadd.f32 %v675, %v676
  %v678 = vsel %vm8, %v654, 0.0
  %v679 = vadd.f32 %v677, %v678
  %v680 = vsel %vm8, %v655, 0.0
  %v681 = vadd.f32 %v679, %v680
  %v682 = vsel %vm8, %v656, 0.0
  %v683 = vadd.f32 %v681, %v682
  %v684 = vsel %vm8, %v657, 0.0
  %v685 = vadd.f32 %v683, %v684
  %v686 = vsel %vm8, %v658, 0.0
  %v687 = vadd.f32 %v685, %v686
  %v688 = vsel %vm8, %v659, 0.0
  %v689 = vadd.f32 %v687, %v688
  %v690 = vsel %vm8, %v660, 0.0
  %v691 = vadd.f32 %v689, %v690
  %v692 = vrot.slane %v691, 4
  %v693 = vadd.f32 %v691, %v692
  %v694 = vrot.slane %v693, 2
  %v695 = vadd.f32 %v693, %v694
  %v696 = vrot.slane %v695, 1
  %v697 = vadd.f32 %v695, %v696
  %v698 = vrcp.pop 128.0
  %v699 = vmul.f32 128.0, %v698
  %v700 = vsub.f32 1.0, %v699
  %v701 = vmul.f32 %v698, %v700
  %v702 = vadd.f32 %v698, %v701
  %vm703 = vweird.f32 %v698
  %v704 = vsel %vm703, %v698, %v702
  %v705 = vmul.f32 %v697, %v704
  %v706 = vsub.f32 %v645, %v705
  %v707 = vsub.f32 %v646, %v705
  %v708 = vsub.f32 %v647, %v705
  %v709 = vsub.f32 %v648, %v705
  %v710 = vsub.f32 %v649, %v705
  %v711 = vsub.f32 %v650, %v705
  %v712 = vsub.f32 %v651, %v705
  %v713 = vsub.f32 %v652, %v705
  %v714 = vsub.f32 %v653, %v705
  %v715 = vsub.f32 %v654, %v705
  %v716 = vsub.f32 %v655, %v705
  %v717 = vsub.f32 %v656, %v705
  %v718 = vsub.f32 %v657, %v705
  %v719 = vsub.f32 %v658, %v705
  %v720 = vsub.f32 %v659, %v705
  %v721 = vsub.f32 %v660, %v705
  %v722 = vmul.f32 %v706, %v706
  %v723 = vmul.f32 %v707, %v707
  %v724 = vmul.f32 %v708, %v708
  %v725 = vmul.f32 %v709, %v709
  %v726 = vmul.f32 %v710, %v710
  %v727 = vmul.f32 %v711, %v711
  %v728 = vmul.f32 %v712, %v712
  %v729 = vmul.f32 %v713, %v713
  %v730 = vmul.f32 %v714, %v714
  %v731 = vmul.f32 %v715, %v715
  %v732 = vmul.f32 %v716, %v716
  %v733 = vmul.f32 %v717, %v717
  %v734 = vmul.f32 %v718, %v718
  %v735 = vmul.f32 %v719, %v719
  %v736 = vmul.f32 %v720, %v720
  %v737 = vmul.f32 %v721, %v721
  %v738 = vsel %vm8, %v722, 0.0
  %v739 = vsel %vm8, %v723, 0.0
  %v740 = vadd.f32 %v738, %v739
  %v741 = vsel %vm8, %v724, 0.0
  %v742 = vadd.f32 %v740, %v741
  %v743 = vsel %vm8, %v725, 0.0
  %v744 = vadd.f32 %v742, %v743
  %v745 = vsel %vm8, %v726, 0.0
  %v746 = vadd.f32 %v744, %v745
  %v747 = vsel %vm8, %v727, 0.0
  %v748 = vadd.f32 %v746, %v747
  %v749 = vsel %vm8, %v728, 0.0
  %v750 = vadd.f32 %v748, %v749
  %v751 = vsel %vm8, %v729, 0.0
  %v752 = vadd.f32 %v750, %v751
  %v753 = vsel %vm8, %v730, 0.0
  %v754 = vadd.f32 %v752, %v753
  %v755 = vsel %vm8, %v731, 0.0
  %v756 = vadd.f32 %v754, %v755
  %v757 = vsel %vm8, %v732, 0.0
  %v758 = vadd.f32 %v756, %v757
  %v759 = vsel %vm8, %v733, 0.0
  %v760 = vadd.f32 %v758, %v759
  %v761 = vsel %vm8, %v734, 0.0
  %v762 = vadd.f32 %v760, %v761
  %v763 = vsel %vm8, %v735, 0.0
  %v764 = vadd.f32 %v762, %v763
  %v765 = vsel %vm8, %v736, 0.0
  %v766 = vadd.f32 %v764, %v765
  %v767 = vsel %vm8, %v737, 0.0
  %v768 = vadd.f32 %v766, %v767
  %v769 = vrot.slane %v768, 4
  %v770 = vadd.f32 %v768, %v769
  %v771 = vrot.slane %v770, 2
  %v772 = vadd.f32 %v770, %v771
  %v773 = vrot.slane %v772, 1
  %v774 = vadd.f32 %v772, %v773
  %v775 = vmul.f32 %v774, %v704
  %v776 = vadd.f32 %v775, 1e-05
  %v777 = vrsqrt.pop %v776
  %v778 = vmul.f32 %v777, %v776
  %v779 = vmul.f32 %v778, %v777
  %v780 = vmul.f32 0.5, %v779
  %v781 = vsub.f32 1.5, %v780
  %v782 = vmul.f32 %v777, %v781
  %vm783 = vweird.f32 %v776
  %vm784 = vweird.f32 %v777
  %vm785 = vmor %vm783, %vm784
  %v786 = vsel %vm785, %v777, %v782
  %v787 = vmul.f32 %v706, %v786
  %v788 = vmul.f32 %v707, %v786
  %v789 = vmul.f32 %v708, %v786
  %v790 = vmul.f32 %v709, %v786
  %v791 = vmul.f32 %v710, %v786
  %v792 = vmul.f32 %v711, %v786
  %v793 = vmul.f32 %v712, %v786
  %v794 = vmul.f32 %v713, %v786
  %v795 = vmul.f32 %v714, %v786
  %v796 = vmul.f32 %v715, %v786
  %v797 = vmul.f32 %v716, %v786
  %v798 = vmul.f32 %v717, %v786
  %v799 = vmul.f32 %v718, %v786
  %v800 = vmul.f32 %v719, %v786
  %v801 = vmul.f32 %v720, %v786
  %v802 = vmul.f32 %v721, %v786
  %803 = vst.msk [vmem:[%s1] sm:$0xff] %vm8, %v787
  %804 = vst.msk [vmem:[%s1 + $0x8] sm:$0xff] %vm8, %v788
  %805 = vst.msk [vmem:[%s1 + $0x10] sm:$0xff] %vm8, %v789
  %806 = vst.msk [vmem:[%s1 + $0x18] sm:$0xff] %vm8, %v790
  %807 = vst.msk [vmem:[%s1 + $0x20] sm:$0xff] %vm8, %v791
  %808 = vst.msk [vmem:[%s1 + $0x28] sm:$0xff] %vm8, %v792
  %809 = vst.msk [vmem:[%s1 + $0x30] sm:$0xff] %vm8, %v793
  %810 = vst.msk [vmem:[%s1 + $0x38] sm:$0xff] %vm8, %v794
  %811 = vst.msk [vmem:[%s1 + $0x40] sm:$0xff] %vm8, %v795
  %812 = vst.msk [vmem:[%s1 + $0x48] sm:$0xff] %vm8, %v796
  %813 = vst.msk [vmem:[%s1 + $0x50] sm:$0xff] %vm8, %v797
  %814 = vst.msk [vmem:[%s1 + $0x58] sm:$0xff] %vm8, %v798
  %815 = vst.msk [vmem:[%s1 + $0x60] sm:$0xff] %vm8, %v799
  %816 = vst.msk [vmem:[%s1 + $0x68] sm:$0xff] %vm8, %v800
  %817 = vst.msk [vmem:[%s1 + $0x70] sm:$0xff] %vm8, %v801
  %818 = vst.msk [vmem:[%s1 + $0x78] sm:$0xff] %vm8, %v802
  // Predicated region
  $region6: #{tpu_custom_call.1} parent=0 // pred_check
    _
  $region7: #{tpu_custom_call.1} parent=0 // pred_check_branch
    %820 = sbr.rel (0) target = $region9
  $region8: #{tpu_custom_call.1} parent=0 // pred_region
    _
  $region9: #{tpu_custom_call.1} parent=0 // pred_fallthru
    _
  // Predicated region
  $region10: #{tpu_custom_call.1} parent=0 // pred_check
    _
  $region11: #{tpu_custom_call.1} parent=0 // pred_check_branch
    %822 = sbr.rel (0) target = $region13
  $region12: #{tpu_custom_call.1} parent=0 // pred_region
    _
  $region13: #{tpu_custom_call.1} parent=0 // pred_fallthru
    _

</llo_original>
